<compile_context>
chip_gen: v6e
topology: v6e:2x2x1
jax: 0.10.0
libtpu: 0.0.40
codegen_flags: <defaults>
</compile_context>

<pallas_src>
import functools

import jax
import jax.numpy as jnp
from jax import lax
from jax.experimental import pallas as pl
from jax.experimental.pallas import tpu as pltpu


def _round_up(x, m):
    return ((x + m - 1) // m) * m


def _supcon_mlp_kernel(x_ref, w1_ref, b1_ref, w2_ref, b2_ref, o_ref):
    # x_ref: (TB, D)  w1_ref: (D, D)  b1_ref: (1, D)
    # w2_ref: (Fp, D) b2_ref: (1, Fp) o_ref: (TB, Fp)
    x = x_ref[...]

    # Contract on the feature axis of both operands -> weights stay in native
    # PyTorch (out_features, in_features) layout; MXU matmul, f32 accumulate.
    y1 = lax.dot_general(x, w1_ref[...],
                         dimension_numbers=(((1,), (1,)), ((), ())),
                         preferred_element_type=jnp.float32)
    y1 = y1 + b1_ref[...]
    h = jnp.tanh(y1)                                      # EUP transcendental

    y2 = lax.dot_general(h, w2_ref[...],
                         dimension_numbers=(((1,), (1,)), ((), ())),
                         preferred_element_type=jnp.float32)
    y2 = y2 + b2_ref[...]

    # F.normalize(dim=1): y / max(||y||, 1e-12) == y * rsqrt(max(||y||^2, 1e-24))
    sq = jnp.sum(y2 * y2, axis=1, keepdims=True)
    inv = lax.rsqrt(jnp.maximum(sq, 1e-24))
    o_ref[...] = (y2 * inv).astype(o_ref.dtype)


@functools.partial(jax.jit, static_argnames=("block_b",))
def supcon_head_forward(x, w1, b1, w2, b2, *, block_b=256):
    """SupConHead('mlp') forward.

    x : (B, D); w1: (D, D), b1: (D,); w2: (F, D), b2: (F,)  (PyTorch layouts).
    Returns (B, F) L2-row-normalized features.
    """
    B, D = x.shape
    f_out = w2.shape[0]

    # Lane-dense output: pad feat_dim up to a multiple of 128 so every store is
    # a full-width vst (not masked vst.msk). Zero columns add nothing to the
    # L2 norm, so the math is unchanged; slice them off at the end.
    fp = _round_up(f_out, 128)
    if fp != f_out:
        w2 = jnp.pad(w2, ((0, fp - f_out), (0, 0)))
        b2 = jnp.pad(b2, (0, fp - f_out))

    # Batch tile: multiple of 8 sublanes; pad batch to a multiple of the tile.
    tb = min(block_b, _round_up(B, 8))
    bp = _round_up(B, tb)
    if bp != B:
        x = jnp.pad(x, ((0, bp - B), (0, 0)))

    b1_2d = b1.reshape(1, D)
    b2_2d = b2.reshape(1, fp)
    grid = (pl.cdiv(bp, tb),)

    # VMEM budget: double-buffered x/out tiles + VMEM-resident weights/biases.
    # Clamped to 64 MiB so the same tile choice is valid on v7x (half the VMEM
    # of v5e/v6e).
    elt = 4
    vmem_est = elt * (2 * tb * D + 2 * tb * fp + D * D + fp * D + D + fp)
    vmem_limit = int(min(64 * 2**20, max(int(vmem_est * 1.5), 16 * 2**20)))

    cost = pl.CostEstimate(
        flops=2 * bp * D * D + 2 * bp * D * fp,
        transcendentals=bp * D,
        bytes_accessed=elt * (bp * D + D * D + D + fp * D + fp + bp * fp),
    )

    out = pl.pallas_call(
        _supcon_mlp_kernel,
        out_shape=jax.ShapeDtypeStruct((bp, fp), x.dtype),
        grid_spec=pltpu.PrefetchScalarGridSpec(
            num_scalar_prefetch=0,
            grid=grid,
            in_specs=[
                pl.BlockSpec((tb, D), lambda i: (i, 0)),   # x: tiled over batch
                pl.BlockSpec((D, D), lambda i: (0, 0)),    # W1: VMEM-resident
                pl.BlockSpec((1, D), lambda i: (0, 0)),    # b1
                pl.BlockSpec((fp, D), lambda i: (0, 0)),   # W2: VMEM-resident
                pl.BlockSpec((1, fp), lambda i: (0, 0)),   # b2
            ],
            out_specs=pl.BlockSpec((tb, fp), lambda i: (i, 0)),
        ),
        compiler_params=pltpu.CompilerParams(
            dimension_semantics=("parallel",),   # rows independent -> megacore on v7x
            vmem_limit_bytes=vmem_limit,
        ),
        cost_estimate=cost,
    )(x, w1, b1_2d, w2, b2_2d)

    return out[:B, :f_out]


if __name__ == "__main__":
    # Small shapes consistent with the module (defaults dim_in=1024, feat_dim=256);
    # feat_dim=64 < 128 also exercises the lane-padding path.
    batch, dim_in, feat_dim = 8, 256, 64

    key = jax.random.PRNGKey(0)
    k_x, k_w1, k_b1, k_w2, k_b2 = jax.random.split(key, 5)

    x = jax.random.normal(k_x, (batch, dim_in), dtype=jnp.float32)

    # nn.Linear-style init: U(-1/sqrt(fan_in), 1/sqrt(fan_in)).
    bound = 1.0 / (dim_in ** 0.5)
    w1 = jax.random.uniform(k_w1, (dim_in, dim_in), minval=-bound, maxval=bound,
                            dtype=jnp.float32)
    b1 = jax.random.uniform(k_b1, (dim_in,), minval=-bound, maxval=bound,
                            dtype=jnp.float32)
    w2 = jax.random.uniform(k_w2, (feat_dim, dim_in), minval=-bound, maxval=bound,
                            dtype=jnp.float32)
    b2 = jax.random.uniform(k_b2, (feat_dim,), minval=-bound, maxval=bound,
                            dtype=jnp.float32)

    out = supcon_head_forward(x, w1, b1, w2, b2)
    out = jax.block_until_ready(out)

    # Plain-JAX reference (same math as the PyTorch module).
    y1 = jnp.tanh(x @ w1.T + b1)
    y2 = y1 @ w2.T + b2
    ref = y2 / jnp.maximum(jnp.linalg.norm(y2, axis=1, keepdims=True), 1e-12)

    assert out.shape == ref.shape, f"shape mismatch: {out.shape} vs {ref.shape}"
    assert jnp.allclose(out, ref, atol=1e-5, rtol=1e-5), "mismatch vs reference"

    print("KERNEL_OK")
</pallas_src>

<mosaic_0001>
module attributes {stable_mosaic.version = 11 : i64} {
  func.func @_supcon_mlp_kernel(%arg0: i32, %arg1: memref<8x256xf32, #tpu.memory_space<vmem>>, %arg2: memref<256x256xf32, #tpu.memory_space<vmem>>, %arg3: memref<1x256xf32, #tpu.memory_space<vmem>>, %arg4: memref<128x256xf32, #tpu.memory_space<vmem>>, %arg5: memref<1x128xf32, #tpu.memory_space<vmem>>, %arg6: memref<8x128xf32, #tpu.memory_space<vmem>>) attributes {dimension_semantics = [#tpu.dimension_semantics<parallel>], iteration_bounds = array<i64: 1>, scalar_prefetch = 0 : i64, scratch_operands = 0 : i64, tpu.core_type = #tpu.core_type<tc>, window_params = [{transform_indices = @transform_0, window_bounds = array<i64: 8, 256>}, {pipeline_mode = #tpu.pipeline_mode<synchronous>, transform_indices = @transform_1, window_bounds = array<i64: 256, 256>}, {pipeline_mode = #tpu.pipeline_mode<synchronous>, transform_indices = @transform_2, window_bounds = array<i64: 1, 256>}, {pipeline_mode = #tpu.pipeline_mode<synchronous>, transform_indices = @transform_3, window_bounds = array<i64: 128, 256>}, {pipeline_mode = #tpu.pipeline_mode<synchronous>, transform_indices = @transform_4, window_bounds = array<i64: 1, 128>}, {transform_indices = @transform_5, window_bounds = array<i64: 8, 128>}]} {
    %c0 = arith.constant 0 : index
    %c0_0 = arith.constant 0 : index
    %0 = vector.load %arg1[%c0, %c0_0] : memref<8x256xf32, #tpu.memory_space<vmem>>, vector<8x256xf32>
    %c0_1 = arith.constant 0 : index
    %c0_2 = arith.constant 0 : index
    %1 = vector.load %arg2[%c0_1, %c0_2] : memref<256x256xf32, #tpu.memory_space<vmem>>, vector<256x256xf32>
    %cst = arith.constant dense<0.000000e+00> : vector<8x256xf32>
    %2 = tpu.matmul %0, %1, %cst {dimension_numbers = #tpu.dot_dimension_numbers<[1], [1], [0], [0], [0, 0, 1, 0], [], []>} : vector<8x256xf32>, vector<256x256xf32>, vector<8x256xf32> -> vector<8x256xf32>
    %c0_3 = arith.constant 0 : index
    %c0_4 = arith.constant 0 : index
    %3 = vector.load %arg3[%c0_3, %c0_4] : memref<1x256xf32, #tpu.memory_space<vmem>>, vector<1x256xf32>
    %4 = vector.broadcast %3 : vector<1x256xf32> to vector<8x256xf32>
    %5 = arith.addf %2, %4 : vector<8x256xf32>
    %6 = math.tanh %5 : vector<8x256xf32>
    %c0_5 = arith.constant 0 : index
    %c0_6 = arith.constant 0 : index
    %7 = vector.load %arg4[%c0_5, %c0_6] : memref<128x256xf32, #tpu.memory_space<vmem>>, vector<128x256xf32>
    %cst_7 = arith.constant dense<0.000000e+00> : vector<8x128xf32>
    %8 = tpu.matmul %6, %7, %cst_7 {dimension_numbers = #tpu.dot_dimension_numbers<[1], [1], [0], [0], [0, 0, 1, 0], [], []>} : vector<8x256xf32>, vector<128x256xf32>, vector<8x128xf32> -> vector<8x128xf32>
    %c0_8 = arith.constant 0 : index
    %c0_9 = arith.constant 0 : index
    %9 = vector.load %arg5[%c0_8, %c0_9] : memref<1x128xf32, #tpu.memory_space<vmem>>, vector<1x128xf32>
    %10 = vector.broadcast %9 : vector<1x128xf32> to vector<8x128xf32>
    %11 = arith.addf %8, %10 : vector<8x128xf32>
    %12 = arith.mulf %11, %11 : vector<8x128xf32>
    %cst_10 = arith.constant dense<0.000000e+00> : vector<8xf32>
    %13 = vector.multi_reduction <add>, %12, %cst_10 [1] : vector<8x128xf32> to vector<8xf32>
    %14 = vector.shape_cast %13 : vector<8xf32> to vector<8x1xf32>
    %cst_11 = arith.constant 1.000000e-24 : f32
    %15 = vector.broadcast %cst_11 : f32 to vector<8x1xf32>
    %16 = arith.maximumf %14, %15 : vector<8x1xf32>
    %17 = math.rsqrt %16 : vector<8x1xf32>
    %18 = vector.broadcast %17 : vector<8x1xf32> to vector<8x128xf32>
    %19 = arith.mulf %11, %18 : vector<8x128xf32>
    %c0_12 = arith.constant 0 : index
    %c0_13 = arith.constant 0 : index
    %20 = vector.load %arg6[%c0_12, %c0_13] : memref<8x128xf32, #tpu.memory_space<vmem>>, vector<8x128xf32>
    tpu.vector_store %arg6[%c0_12, %c0_13], %19 {strides = array<i32>} : memref<8x128xf32, #tpu.memory_space<vmem>>, vector<8x128xf32>,
    return
  }
  func.func @transform_0(%arg0: i32) -> (i32, i32) {
    %c0_i32 = arith.constant 0 : i32
    %c0_i32_0 = arith.constant 0 : i32
    return %arg0, %c0_i32 : i32, i32
  }
  func.func @transform_1(%arg0: i32) -> (i32, i32) {
    %c0_i32 = arith.constant 0 : i32
    %c0_i32_0 = arith.constant 0 : i32
    %c0_i32_1 = arith.constant 0 : i32
    return %c0_i32, %c0_i32_0 : i32, i32
  }
  func.func @transform_2(%arg0: i32) -> (i32, i32) {
    %c0_i32 = arith.constant 0 : i32
    %c0_i32_0 = arith.constant 0 : i32
    %c0_i32_1 = arith.constant 0 : i32
    return %c0_i32, %c0_i32_0 : i32, i32
  }
  func.func @transform_3(%arg0: i32) -> (i32, i32) {
    %c0_i32 = arith.constant 0 : i32
    %c0_i32_0 = arith.constant 0 : i32
    %c0_i32_1 = arith.constant 0 : i32
    return %c0_i32, %c0_i32_0 : i32, i32
  }
  func.func @transform_4(%arg0: i32) -> (i32, i32) {
    %c0_i32 = arith.constant 0 : i32
    %c0_i32_0 = arith.constant 0 : i32
    %c0_i32_1 = arith.constant 0 : i32
    return %c0_i32, %c0_i32_0 : i32, i32
  }
  func.func @transform_5(%arg0: i32) -> (i32, i32) {
    %c0_i32 = arith.constant 0 : i32
    %c0_i32_0 = arith.constant 0 : i32
    return %arg0, %c0_i32 : i32, i32
  }
}

</mosaic_0001>

<llo_original>
// kernel: supcon_head_forward.1
$region0: #{supcon_head_forward.1}
  #allocation0 [shape = 'u32[]', space=smem, size = 0x4, offset = 0x4, fixed_abs, tag = 'smem constant byte address 0x4 - core index']
  #allocation1 [shape = 'u32[144,128]{1,0:T(1,128)}', space=vmem, size = 0x12000, scoped, tag = 'internal scratch']
  %s0 = inlined_call_operand.vmem [shape: f32[8,256], index: 0, kind: input, shape index: {}]
  %s1 = inlined_call_operand.hbm [shape: f32[256,256], index: 1, kind: input, shape index: {}]
  %s2 = inlined_call_operand.vmem [shape: f32[1,256], index: 2, kind: input, shape index: {}]
  %s3 = inlined_call_operand.vmem [shape: f32[128,256], index: 3, kind: input, shape index: {}]
  %s4 = inlined_call_operand.vmem [shape: f32[1,128], index: 4, kind: input, shape index: {}]
  %s5 = inlined_call_operand.hbm [shape: f32[8,128], index: 5, kind: output, shape index: {}]
  %s6 = sld [smem:[#allocation0]]
  $region34: #{supcon_head_forward.1} parent=0
    _
  %s8 = ssub.s32 1, %s6
  %s9 = scalar_select 0, %s8, %s6
  $region1: #{supcon_head_forward.1} parent=0
    #allocation2 [shape = 'u8[262144]{0}', space=vmem, size = 0x40000, scoped, tag = 'input window, operand 1, single buffered']
    #allocation3 [shape = 's32[1]{0}', space=sflag, size = 0x4, scoped, tag = 'scoped memory for supcon_head_forward.1']
    #allocation4 [shape = 's32[1]{0}', space=sflag, size = 0x4, scoped, tag = 'scoped memory for supcon_head_forward.1']
    #allocation5 [shape = 'u8[4096]{0}', space=vmem, size = 0x1000, scoped, tag = 'output window, operand 0, single buffered']
    %10 = vsyncpa [#allocation3], 0
    %11 = vsyncpa [#allocation4], 0
    // Predicated region
    $region2: #{supcon_head_forward.1} parent=1 // pred_check
      _
    $region3: #{supcon_head_forward.1} parent=1 // pred_check_branch
      %13 = sbr.rel (0) target = $region5
    $region4: #{supcon_head_forward.1} parent=1 // pred_region
      _
    $region5: #{supcon_head_forward.1} parent=1 // pred_fallthru
      _
    // Predicated region
    $region6: #{supcon_head_forward.1} parent=1 // pred_check
      _
    $region7: #{supcon_head_forward.1} parent=1 // pred_check_branch
      %15 = sbr.rel (0) target = $region9
    $region8: #{supcon_head_forward.1} parent=1 // pred_region
      %s17 = ssub.s32 8192, 8192
      %18 = vsyncadd [#allocation3], %s17
      %s19 = sshll.u32 [#allocation2], 4
      %s20 = int_to_ptr.vmem [resolvable:$true] %s19
      %25 = dma.hbm_to_vmem [thread:$0]  %s1, 8192, %s20, [#allocation3], 256, 256, 16
    $region9: #{supcon_head_forward.1} parent=1 // pred_fallthru
      _
    // Predicated region
    $region10: #{supcon_head_forward.1} parent=1 // pred_check
      _
    $region11: #{supcon_head_forward.1} parent=1 // pred_check_branch
      %27 = sbr.rel (0) target = $region13
    $region12: #{supcon_head_forward.1} parent=1 // pred_region
      _
    $region13: #{supcon_head_forward.1} parent=1 // pred_fallthru
      _
    // Predicated region
    $region14: #{supcon_head_forward.1} parent=1 // pred_check
      _
    $region15: #{supcon_head_forward.1} parent=1 // pred_check_branch
      %29 = sbr.rel (0) target = $region17
    $region16: #{supcon_head_forward.1} parent=1 // pred_region
      _
    $region17: #{supcon_head_forward.1} parent=1 // pred_fallthru
      _
    // Predicated region
    $region18: #{supcon_head_forward.1} parent=1 // pred_check
      _
    $region19: #{supcon_head_forward.1} parent=1 // pred_check_branch
      %31 = sbr.rel (0) target = $region21
    $region20: #{supcon_head_forward.1} parent=1 // pred_region
      _
    $region21: #{supcon_head_forward.1} parent=1 // pred_fallthru
      _
    // Predicated region
    $region22: #{supcon_head_forward.1} parent=1 // pred_check
      _
    $region23: #{supcon_head_forward.1} parent=1 // pred_check_branch
      %33 = sbr.rel (0) target = $region25
    $region24: #{supcon_head_forward.1} parent=1 // pred_region
      %34 = dma.done [#allocation3], 8192
    $region25: #{supcon_head_forward.1} parent=1 // pred_fallthru
      _
    %v35 = vld [vmem:[%s0] sm:$0xff]
    %v36 = vld [vmem:[%s0 + $0x8] sm:$0xff]
    %v37 = vld [vmem:[#allocation2] sm:$0xff]
    %v38 = vld [vmem:[#allocation2 + $0x8] sm:$0xff]
    %v39 = vld [vmem:[#allocation2 + $0x10] sm:$0xff]
    %v40 = vld [vmem:[#allocation2 + $0x18] sm:$0xff]
    %v41 = vld [vmem:[#allocation2 + $0x20] sm:$0xff]
    %v42 = vld [vmem:[#allocation2 + $0x28] sm:$0xff]
    %v43 = vld [vmem:[#allocation2 + $0x30] sm:$0xff]
    %v44 = vld [vmem:[#allocation2 + $0x38] sm:$0xff]
    %v45 = vld [vmem:[#allocation2 + $0x40] sm:$0xff]
    %v46 = vld [vmem:[#allocation2 + $0x48] sm:$0xff]
    %v47 = vld [vmem:[#allocation2 + $0x50] sm:$0xff]
    %v48 = vld [vmem:[#allocation2 + $0x58] sm:$0xff]
    %v49 = vld [vmem:[#allocation2 + $0x60] sm:$0xff]
    %v50 = vld [vmem:[#allocation2 + $0x68] sm:$0xff]
    %v51 = vld [vmem:[#allocation2 + $0x70] sm:$0xff]
    %v52 = vld [vmem:[#allocation2 + $0x78] sm:$0xff]
    %v53 = vld [vmem:[#allocation2 + $0x80] sm:$0xff]
    %v54 = vld [vmem:[#allocation2 + $0x88] sm:$0xff]
    %v55 = vld [vmem:[#allocation2 + $0x90] sm:$0xff]
    %v56 = vld [vmem:[#allocation2 + $0x98] sm:$0xff]
    %v57 = vld [vmem:[#allocation2 + $0xa0] sm:$0xff]
    %v58 = vld [vmem:[#allocation2 + $0xa8] sm:$0xff]
    %v59 = vld [vmem:[#allocation2 + $0xb0] sm:$0xff]
    %v60 = vld [vmem:[#allocation2 + $0xb8] sm:$0xff]
    %v61 = vld [vmem:[#allocation2 + $0xc0] sm:$0xff]
    %v62 = vld [vmem:[#allocation2 + $0xc8] sm:$0xff]
    %v63 = vld [vmem:[#allocation2 + $0xd0] sm:$0xff]
    %v64 = vld [vmem:[#allocation2 + $0xd8] sm:$0xff]
    %v65 = vld [vmem:[#allocation2 + $0xe0] sm:$0xff]
    %v66 = vld [vmem:[#allocation2 + $0xe8] sm:$0xff]
    %v67 = vld [vmem:[#allocation2 + $0xf0] sm:$0xff]
    %v68 = vld [vmem:[#allocation2 + $0xf8] sm:$0xff]
    %v69 = vld [vmem:[#allocation2 + $0x100] sm:$0xff]
    %v70 = vld [vmem:[#allocation2 + $0x108] sm:$0xff]
    %v71 = vld [vmem:[#allocation2 + $0x110] sm:$0xff]
    %v72 = vld [vmem:[#allocation2 + $0x118] sm:$0xff]
    %v73 = vld [vmem:[#allocation2 + $0x120] sm:$0xff]
    %v74 = vld [vmem:[#allocation2 + $0x128] sm:$0xff]
    %v75 = vld [vmem:[#allocation2 + $0x130] sm:$0xff]
    %v76 = vld [vmem:[#allocation2 + $0x138] sm:$0xff]
    %v77 = vld [vmem:[#allocation2 + $0x140] sm:$0xff]
    %v78 = vld [vmem:[#allocation2 + $0x148] sm:$0xff]
    %v79 = vld [vmem:[#allocation2 + $0x150] sm:$0xff]
    %v80 = vld [vmem:[#allocation2 + $0x158] sm:$0xff]
    %v81 = vld [vmem:[#allocation2 + $0x160] sm:$0xff]
    %v82 = vld [vmem:[#allocation2 + $0x168] sm:$0xff]
    %v83 = vld [vmem:[#allocation2 + $0x170] sm:$0xff]
    %v84 = vld [vmem:[#allocation2 + $0x178] sm:$0xff]
    %v85 = vld [vmem:[#allocation2 + $0x180] sm:$0xff]
    %v86 = vld [vmem:[#allocation2 + $0x188] sm:$0xff]
    %v87 = vld [vmem:[#allocation2 + $0x190] sm:$0xff]
    %v88 = vld [vmem:[#allocation2 + $0x198] sm:$0xff]
    %v89 = vld [vmem:[#allocation2 + $0x1a0] sm:$0xff]
    %v90 = vld [vmem:[#allocation2 + $0x1a8] sm:$0xff]
    %v91 = vld [vmem:[#allocation2 + $0x1b0] sm:$0xff]
    %v92 = vld [vmem:[#allocation2 + $0x1b8] sm:$0xff]
    %v93 = vld [vmem:[#allocation2 + $0x1c0] sm:$0xff]
    %v94 = vld [vmem:[#allocation2 + $0x1c8] sm:$0xff]
    %v95 = vld [vmem:[#allocation2 + $0x1d0] sm:$0xff]
    %v96 = vld [vmem:[#allocation2 + $0x1d8] sm:$0xff]
    %v97 = vld [vmem:[#allocation2 + $0x1e0] sm:$0xff]
    %v98 = vld [vmem:[#allocation2 + $0x1e8] sm:$0xff]
    %v99 = vld [vmem:[#allocation2 + $0x1f0] sm:$0xff]
    %v100 = vld [vmem:[#allocation2 + $0x1f8] sm:$0xff]
    %v101 = vld [vmem:[%s2] sm:$0x3]
    %v103 = vlaneseq
    %v104 = vshrl.u32 %v103, 7
    %v105 = vsub.s32 0, %v104
    %v106 = vrot.slane %v101, %v105
    %v107 = vlaneseq
    %v108 = vshrl.u32 %v107, 7
    %v109 = vsub.s32 1, %v108
    %v110 = vrot.slane %v101, %v109
    %113 = vmatprep.subr.mxu0 %v68
    %114 = vmatpush1.xpose.msra.mxu0 %v67
    %115 = vmatprep.subr.mxu0 %v66
    %116 = vmatpush1.xpose.msra.mxu0 %v65
    %117 = vmatprep.subr.mxu0 %v64
    %118 = vmatpush1.xpose.msra.mxu0 %v63
    %119 = vmatprep.subr.mxu0 %v62
    %120 = vmatpush1.xpose.msra.mxu0 %v61
    %121 = vmatprep.subr.mxu0 %v60
    %122 = vmatpush1.xpose.msra.mxu0 %v59
    %123 = vmatprep.subr.mxu0 %v58
    %124 = vmatpush1.xpose.msra.mxu0 %v57
    %125 = vmatprep.subr.mxu0 %v56
    %126 = vmatpush1.xpose.msra.mxu0 %v55
    %127 = vmatprep.subr.mxu0 %v54
    %128 = vmatpush1.xpose.msra.mxu0 %v53
    %129 = vmatprep.subr.mxu0 %v52
    %130 = vmatpush1.xpose.msra.mxu0 %v51
    %131 = vmatprep.subr.mxu0 %v50
    %132 = vmatpush1.xpose.msra.mxu0 %v49
    %133 = vmatprep.subr.mxu0 %v48
    %134 = vmatpush1.xpose.msra.mxu0 %v47
    %135 = vmatprep.subr.mxu0 %v46
    %136 = vmatpush1.xpose.msra.mxu0 %v45
    %137 = vmatprep.subr.mxu0 %v44
    %138 = vmatpush1.xpose.msra.mxu0 %v43
    %139 = vmatprep.subr.mxu0 %v42
    %140 = vmatpush1.xpose.msra.mxu0 %v41
    %141 = vmatprep.subr.mxu0 %v40
    %142 = vmatpush1.xpose.msra.mxu0 %v39
    %143 = vmatprep.subr.mxu0 %v38
    %144 = vmatpush1.xpose.msra.mxu0 %v37
    %145 = vmatprep.subr.mxu0 %v100
    %146 = vmatpush2.xpose.msra.mxu0 %v99
    %147 = vmatprep.subr.mxu0 %v98
    %148 = vmatpush2.xpose.msra.mxu0 %v97
    %149 = vmatprep.subr.mxu0 %v96
    %150 = vmatpush2.xpose.msra.mxu0 %v95
    %151 = vmatprep.subr.mxu0 %v94
    %152 = vmatpush2.xpose.msra.mxu0 %v93
    %153 = vmatprep.subr.mxu0 %v92
    %154 = vmatpush2.xpose.msra.mxu0 %v91
    %155 = vmatprep.subr.mxu0 %v90
    %156 = vmatpush2.xpose.msra.mxu0 %v89
    %157 = vmatprep.subr.mxu0 %v88
    %158 = vmatpush2.xpose.msra.mxu0 %v87
    %159 = vmatprep.subr.mxu0 %v86
    %160 = vmatpush2.xpose.msra.mxu0 %v85
    %161 = vmatprep.subr.mxu0 %v84
    %162 = vmatpush2.xpose.msra.mxu0 %v83
    %163 = vmatprep.subr.mxu0 %v82
    %164 = vmatpush2.xpose.msra.mxu0 %v81
    %165 = vmatprep.subr.mxu0 %v80
    %166 = vmatpush2.xpose.msra.mxu0 %v79
    %167 = vmatprep.subr.mxu0 %v78
    %168 = vmatpush2.xpose.msra.mxu0 %v77
    %169 = vmatprep.subr.mxu0 %v76
    %170 = vmatpush2.xpose.msra.mxu0 %v75
    %171 = vmatprep.subr.mxu0 %v74
    %172 = vmatpush2.xpose.msra.mxu0 %v73
    %173 = vmatprep.subr.mxu0 %v72
    %174 = vmatpush2.xpose.msra.mxu0 %v71
    %175 = vmatprep.subr.mxu0 %v70
    %176 = vmatpush2.xpose.msra.mxu0 %v69
    %177 = vmatprep.mubr.f32.mxu0 %v36
    %178 = vmatmul.mubr.f32.gmra.mxu0 %v35
    %v179 = vpop.f32.mrf.mxu0
    %v180 = vadd.f32 %v106, %v179
    %v181 = vpop.f32.mrf.mxu0
    %v182 = vadd.f32 %v110, %v181
    %183 = vdwg.mxu0
    %v184 = vtanh.pop %v180
    %v185 = vtanh.pop %v182
    %v186 = vld [vmem:[%s3] sm:$0xff]
    %v187 = vld [vmem:[%s3 + $0x8] sm:$0xff]
    %v188 = vld [vmem:[%s3 + $0x10] sm:$0xff]
    %v189 = vld [vmem:[%s3 + $0x18] sm:$0xff]
    %v190 = vld [vmem:[%s3 + $0x20] sm:$0xff]
    %v191 = vld [vmem:[%s3 + $0x28] sm:$0xff]
    %v192 = vld [vmem:[%s3 + $0x30] sm:$0xff]
    %v193 = vld [vmem:[%s3 + $0x38] sm:$0xff]
    %v194 = vld [vmem:[%s3 + $0x40] sm:$0xff]
    %v195 = vld [vmem:[%s3 + $0x48] sm:$0xff]
    %v196 = vld [vmem:[%s3 + $0x50] sm:$0xff]
    %v197 = vld [vmem:[%s3 + $0x58] sm:$0xff]
    %v198 = vld [vmem:[%s3 + $0x60] sm:$0xff]
    %v199 = vld [vmem:[%s3 + $0x68] sm:$0xff]
    %v200 = vld [vmem:[%s3 + $0x70] sm:$0xff]
    %v201 = vld [vmem:[%s3 + $0x78] sm:$0xff]
    %v202 = vld [vmem:[%s3 + $0x80] sm:$0xff]
    %v203 = vld [vmem:[%s3 + $0x88] sm:$0xff]
    %v204 = vld [vmem:[%s3 + $0x90] sm:$0xff]
    %v205 = vld [vmem:[%s3 + $0x98] sm:$0xff]
    %v206 = vld [vmem:[%s3 + $0xa0] sm:$0xff]
    %v207 = vld [vmem:[%s3 + $0xa8] sm:$0xff]
    %v208 = vld [vmem:[%s3 + $0xb0] sm:$0xff]
    %v209 = vld [vmem:[%s3 + $0xb8] sm:$0xff]
    %v210 = vld [vmem:[%s3 + $0xc0] sm:$0xff]
    %v211 = vld [vmem:[%s3 + $0xc8] sm:$0xff]
    %v212 = vld [vmem:[%s3 + $0xd0] sm:$0xff]
    %v213 = vld [vmem:[%s3 + $0xd8] sm:$0xff]
    %v214 = vld [vmem:[%s3 + $0xe0] sm:$0xff]
    %v215 = vld [vmem:[%s3 + $0xe8] sm:$0xff]
    %v216 = vld [vmem:[%s3 + $0xf0] sm:$0xff]
    %v217 = vld [vmem:[%s3 + $0xf8] sm:$0xff]
    %v218 = vld [vmem:[%s4] sm:$0x1]
    %v220 = vlaneseq
    %v221 = vshrl.u32 %v220, 7
    %v222 = vsub.s32 0, %v221
    %v223 = vrot.slane %v218, %v222
    %225 = vmatprep.subr.mxu0 %v217
    %226 = vmatpush1.xpose.msra.mxu0 %v216
    %227 = vmatprep.subr.mxu0 %v215
    %228 = vmatpush1.xpose.msra.mxu0 %v214
    %229 = vmatprep.subr.mxu0 %v213
    %230 = vmatpush1.xpose.msra.mxu0 %v212
    %231 = vmatprep.subr.mxu0 %v211
    %232 = vmatpush1.xpose.msra.mxu0 %v210
    %233 = vmatprep.subr.mxu0 %v209
    %234 = vmatpush1.xpose.msra.mxu0 %v208
    %235 = vmatprep.subr.mxu0 %v207
    %236 = vmatpush1.xpose.msra.mxu0 %v206
    %237 = vmatprep.subr.mxu0 %v205
    %238 = vmatpush1.xpose.msra.mxu0 %v204
    %239 = vmatprep.subr.mxu0 %v203
    %240 = vmatpush1.xpose.msra.mxu0 %v202
    %241 = vmatprep.subr.mxu0 %v201
    %242 = vmatpush1.xpose.msra.mxu0 %v200
    %243 = vmatprep.subr.mxu0 %v199
    %244 = vmatpush1.xpose.msra.mxu0 %v198
    %245 = vmatprep.subr.mxu0 %v197
    %246 = vmatpush1.xpose.msra.mxu0 %v196
    %247 = vmatprep.subr.mxu0 %v195
    %248 = vmatpush1.xpose.msra.mxu0 %v194
    %249 = vmatprep.subr.mxu0 %v193
    %250 = vmatpush1.xpose.msra.mxu0 %v192
    %251 = vmatprep.subr.mxu0 %v191
    %252 = vmatpush1.xpose.msra.mxu0 %v190
    %253 = vmatprep.subr.mxu0 %v189
    %254 = vmatpush1.xpose.msra.mxu0 %v188
    %255 = vmatprep.subr.mxu0 %v187
    %256 = vmatpush1.xpose.msra.mxu0 %v186
    %257 = vmatprep.subr.mxu0 0.0
    %258 = vmatpush2.xpose.msra.mxu0 0.0
    %259 = vmatprep.subr.mxu0 0.0
    %260 = vmatpush2.xpose.msra.mxu0 0.0
    %261 = vmatprep.subr.mxu0 0.0
    %262 = vmatpush2.xpose.msra.mxu0 0.0
    %263 = vmatprep.subr.mxu0 0.0
    %264 = vmatpush2.xpose.msra.mxu0 0.0
    %265 = vmatprep.subr.mxu0 0.0
    %266 = vmatpush2.xpose.msra.mxu0 0.0
    %267 = vmatprep.subr.mxu0 0.0
    %268 = vmatpush2.xpose.msra.mxu0 0.0
    %269 = vmatprep.subr.mxu0 0.0
    %270 = vmatpush2.xpose.msra.mxu0 0.0
    %271 = vmatprep.subr.mxu0 0.0
    %272 = vmatpush2.xpose.msra.mxu0 0.0
    %273 = vmatprep.subr.mxu0 0.0
    %274 = vmatpush2.xpose.msra.mxu0 0.0
    %275 = vmatprep.subr.mxu0 0.0
    %276 = vmatpush2.xpose.msra.mxu0 0.0
    %277 = vmatprep.subr.mxu0 0.0
    %278 = vmatpush2.xpose.msra.mxu0 0.0
    %279 = vmatprep.subr.mxu0 0.0
    %280 = vmatpush2.xpose.msra.mxu0 0.0
    %281 = vmatprep.subr.mxu0 0.0
    %282 = vmatpush2.xpose.msra.mxu0 0.0
    %283 = vmatprep.subr.mxu0 0.0
    %284 = vmatpush2.xpose.msra.mxu0 0.0
    %285 = vmatprep.subr.mxu0 0.0
    %286 = vmatpush2.xpose.msra.mxu0 0.0
    %287 = vmatprep.subr.mxu0 0.0
    %288 = vmatpush2.xpose.msra.mxu0 0.0
    %289 = vmatprep.mubr.f32.mxu0 %v185
    %290 = vmatmul.mubr.f32.gmra.mxu0 %v184
    %v291 = vpop.f32.mrf.mxu0
    %v292 = vadd.f32 %v223, %v291
    %v293 = vpop.f32.mrf.mxu0
    %294 = vdwg.mxu0
    %v295 = vmul.f32 %v292, %v292
    %296 = vadd.xlane.f32.xlu0 %v295
    %v297 = vpop.xlane.xlu0 %296
    %v298 = vmax.f32 %v297, 1e-24
    %v299 = vrsqrt.pop %v298
    %v300 = vmul.f32 %v292, %v299
    %301 = vst [vmem:[#allocation5] sm:$0xff] %v300
    // Predicated region
    $region26: #{supcon_head_forward.1} parent=1 // pred_check
      _
    $region27: #{supcon_head_forward.1} parent=1 // pred_check_branch
      %303 = sbr.rel (0) target = $region29
    $region28: #{supcon_head_forward.1} parent=1 // pred_region
      %s305 = ssub.s32 128, 128
      %306 = vsyncadd [#allocation4], %s305
      %s308 = sshll.u32 [#allocation5], 4
      %s309 = int_to_ptr.vmem [resolvable:$true] %s308
      %311 = dma.vmem_to_hbm [thread:$0]  %s309, 128, %s5, [#allocation4]
    $region29: #{supcon_head_forward.1} parent=1 // pred_fallthru
      _
    // Predicated region
    $region30: #{supcon_head_forward.1} parent=1 // pred_check
      _
    $region31: #{supcon_head_forward.1} parent=1 // pred_check_branch
      %313 = sbr.rel (0) target = $region33
    $region32: #{supcon_head_forward.1} parent=1 // pred_region
      %314 = dma.done [#allocation4], 128
    $region33: #{supcon_head_forward.1} parent=1 // pred_fallthru
      _
    %315 = vsyncpa [#allocation3], 1
    %316 = vsyncpa [#allocation4], 1

</llo_original>
